<compile_context>
chip_gen: v7x
topology: tpu7x:2x2x1
jax: 0.10.0
libtpu: 0.0.40
codegen_flags: <defaults>
</compile_context>

<pallas_src>
import jax
import jax.numpy as jnp
from jax.experimental import pallas as pl
from jax.experimental.pallas import tpu as pltpu

_NEG_BIG = -1e30  # "minus infinity" that never produces inf-inf NaNs


# --------------------------------------------------------------------------
# Kernel
# --------------------------------------------------------------------------
def _make_kernel(S, block_s, num_s_chunks, use_mxu):
    """Builds the attention kernel for a (block_b, block_s, H) input slab.

    Grid is (batch_blocks, s_chunks); the S axis is an online-softmax
    reduction ('arbitrary'), the batch axis is 'parallel'.
    """
    s_pad = num_s_chunks * block_s
    ragged_s = s_pad != S

    def kernel(b_ref, x_ref, w_ref, ctx_ref, aw_ref, m_ref, l_ref, acc_ref, s_ref):
        # b_ref   : SMEM (1,)              -- Linear(H, 1) bias
        # x_ref   : VMEM (BB, TS, H)       -- one (batch block, S chunk) slab
        # w_ref   : VMEM (H, 1) or (1, H)  -- Linear(H, 1) weight
        # ctx_ref : VMEM (BB, H)           -- context output (resident over S chunks)
        # aw_ref  : VMEM (BB, S)           -- attention weights (resident over S chunks)
        # m/l_ref : VMEM (BB, 1) f32       -- running max / running denom
        # acc_ref : VMEM (BB, H) f32       -- running (unnormalized) context
        # s_ref   : VMEM (BB, S_pad) f32   -- stashed tanh scores
        j = pl.program_id(1)
        last_j = pl.num_programs(1) - 1

        @pl.when(j == 0)
        def _init():
            m_ref[...] = jnp.full_like(m_ref, _NEG_BIG)
            l_ref[...] = jnp.zeros_like(l_ref)
            acc_ref[...] = jnp.zeros_like(acc_ref)

        x = x_ref[...]                                   # (BB, TS, H), input dtype
        bb, ts, hd = x.shape
        bias = b_ref[0].astype(jnp.float32)

        valid = None
        if ragged_s:
            # Last S chunk is padded: mask it and zero the padded rows of x so
            # stale VMEM (possibly NaN) cannot leak via 0 * NaN into the matmul.
            s_idx = j * block_s + jax.lax.broadcasted_iota(jnp.int32, (bb, ts), 1)
            valid = s_idx < S
            x = jnp.where(valid[:, :, None], x, jnp.zeros_like(x))

        if use_mxu:
            # scores = tanh(x @ w + b): a degenerate N=1 matmul on the MXU
            # (a handful of vmatmul pushes) instead of a full-slab VPU multiply
            # plus an XLU lane reduce.
            s_col = jnp.dot(x.reshape(bb * ts, hd), w_ref[...],
                            preferred_element_type=jnp.float32)        # (BB*TS, 1)
            scores = jnp.tanh(s_col.reshape(bb, ts) + bias)            # (BB, TS)
        else:
            # Known-good VPU path (previous kernel): broadcast multiply + lane
            # reduce over H, in f32.
            w_row = w_ref[...].astype(jnp.float32)                      # (1, H)
            scores = jnp.tanh(
                jnp.sum(x.astype(jnp.float32) * w_row[None, :, :], axis=-1) + bias)

        if ragged_s:
            scores = jnp.where(valid, scores, _NEG_BIG)

        # ---- online softmax over the streamed S axis (f32) ----------------
        m_prev = m_ref[...]
        m_new = jnp.maximum(m_prev, jnp.max(scores, axis=-1, keepdims=True))
        alpha = jnp.exp(m_prev - m_new)                                 # (BB, 1)
        p = jnp.exp(scores - m_new)                                     # (BB, TS)
        l_ref[...] = alpha * l_ref[...] + jnp.sum(p, axis=-1, keepdims=True)

        if use_mxu:
            # context partial sum: degenerate M=1 batched matmul on the MXU,
            # no attn relayout and no full-slab f32 temporary.
            part = jnp.einsum("bs,bsh->bh", p.astype(x.dtype), x,
                              preferred_element_type=jnp.float32)       # (BB, H)
        else:
            part = jnp.sum(p[:, :, None] * x.astype(jnp.float32), axis=1)
        acc_ref[...] = alpha * acc_ref[...] + part
        m_ref[...] = m_new

        # Stash the raw tanh scores; the weights are normalized once at the end.
        if num_s_chunks == 1:
            s_ref[...] = scores
        else:
            s_ref[:, pl.ds(j * block_s, block_s)] = scores

        @pl.when(j == last_j)
        def _finalize():
            l = l_ref[...]
            r = pl.reciprocal(l, approx=True)        # EUP slot (otherwise idle)
            r = r * (2.0 - l * r)                    # one Newton step, ~1e-7 rel err
            ctx_ref[...] = (acc_ref[...] * r).astype(ctx_ref.dtype)
            aw = jnp.exp(s_ref[...] - m_ref[...]) * r                   # (BB, S_pad)
            if ragged_s:
                aw = aw[:, :S]
            aw_ref[...] = aw.astype(aw_ref.dtype)

    return kernel


# --------------------------------------------------------------------------
# Block sizing (generation aware)
# --------------------------------------------------------------------------
def _vmem_capacity_bytes():
    try:
        info = pltpu.get_tpu_info()
        cap = getattr(info, "vmem_capacity_bytes", None)
        if cap:
            return int(cap)
    except Exception:
        pass
    return 128 * 1024 * 1024


def _choose_blocks(B, S, H, itemsize, target_bytes):
    """Pick (block_b, block_s) for the (block_b, block_s, H) input slab."""
    row_bytes = max(S * H * itemsize, 1)       # one batch row over the full S
    min_b = min(B, 8)                          # sublane floor (or the full batch)
    if row_bytes * min_b <= target_bytes:
        # No S streaming needed: take as many batch rows as fit the target, but
        # aim for >=4 grid steps (>=2 per v7x core) while keeping slabs >= ~2 MiB.
        bs = S
        bb = target_bytes // row_bytes
        if B >= 4:
            quarter = -(-B // 4)                                 # ceil(B / 4)
            floor_2mib = -(-(2 * 1024 * 1024) // row_bytes)      # ceil(2 MiB / row)
            bb = max(min(bb, quarter), min(bb, floor_2mib))
        bb = max(min_b, min(int(bb), B))
        if bb > 8:
            bb = (bb // 8) * 8                                   # sublane-dense blocks
    else:
        # Stream S: fix the batch block at <=8 rows and chunk the sequence so the
        # working set stays bounded for any S*H (x is still read from HBM once).
        bb = min_b
        bs = max(8, target_bytes // (bb * H * itemsize))
        bs = min(int(bs), S)
        if bs > 8:
            bs = (bs // 8) * 8                                   # (8, 128) sublane rule
    return int(bb), int(bs)


# --------------------------------------------------------------------------
# Wrapper
# --------------------------------------------------------------------------
_scores_via_mxu_ok = True  # flipped off if this Mosaic build rejects the MXU variant


def attention_forward(lstm_output, w, b, *, block_b=None, block_s=None):
    """lstm_output: (B, S, H); w: (H, 1); b: (1,) -> (context (B, H), attn (B, S))."""
    global _scores_via_mxu_ok
    B, S, H = lstm_output.shape
    dtype = lstm_output.dtype

    vmem_cap = _vmem_capacity_bytes()
    small_vmem = vmem_cap <= 64 * 1024 * 1024            # v7x-class parts
    target_bytes = (4 if small_vmem else 8) * 1024 * 1024
    vmem_limit = (48 if small_vmem else 64) * 1024 * 1024

    bb, bs = _choose_blocks(B, S, H, dtype.itemsize, target_bytes)
    if block_b is not None:
        bb = int(min(block_b, B))
    if block_s is not None:
        bs = int(min(block_s, S))

    nb = pl.cdiv(B, bb)
    ns = pl.cdiv(S, bs)
    s_pad = ns * bs

    def call(use_mxu):
        # MXU variant consumes the weight as a (H, 1) column (natural MXU RHS);
        # the VPU fallback consumes it as a lane-dense (1, H) row.
        w_in = jnp.reshape(w, (H, 1) if use_mxu else (1, H)).astype(dtype)
        kernel = _make_kernel(S=S, block_s=bs, num_s_chunks=ns, use_mxu=use_mxu)

        grid_spec = pltpu.PrefetchScalarGridSpec(
            num_scalar_prefetch=0,
            grid=(nb, ns),
            in_specs=[
                pl.BlockSpec(memory_space=pltpu.SMEM),                 # bias (1,)
                pl.BlockSpec((bb, bs, H), lambda i, j: (i, j, 0)),     # lstm_output
                pl.BlockSpec(w_in.shape, lambda i, j: (0, 0)),         # weight
            ],
            out_specs=[
                pl.BlockSpec((bb, H), lambda i, j: (i, 0)),            # context
                pl.BlockSpec((bb, S), lambda i, j: (i, 0)),            # attn weights
            ],
            scratch_shapes=[
                pltpu.VMEM((bb, 1), jnp.float32),      # running max
                pltpu.VMEM((bb, 1), jnp.float32),      # running denominator
                pltpu.VMEM((bb, H), jnp.float32),      # context accumulator
                pltpu.VMEM((bb, s_pad), jnp.float32),  # stashed tanh scores
            ],
        )

        return pl.pallas_call(
            kernel,
            out_shape=(
                jax.ShapeDtypeStruct((B, H), dtype),
                jax.ShapeDtypeStruct((B, S), dtype),
            ),
            grid_spec=grid_spec,
            compiler_params=pltpu.CompilerParams(
                dimension_semantics=("parallel", "arbitrary"),
                vmem_limit_bytes=vmem_limit,
            ),
        )(b, lstm_output, w_in)

    if _scores_via_mxu_ok:
        try:
            return call(use_mxu=True)
        except Exception:
            # TODO(synk): drop this fallback once the (BB*TS,1)->(BB,TS) relayout of
            # the MXU score matmul is confirmed on every deployed Mosaic version; the
            # fallback keeps the identical streaming structure but performs the two
            # reductions on the VPU (the previously validated lowering).
            _scores_via_mxu_ok = False
    return call(use_mxu=False)


# --------------------------------------------------------------------------
# Reference + self-test
# --------------------------------------------------------------------------
def _reference(lstm_output, w, b):
    scores = jnp.tanh(jnp.einsum("bsh,ho->bso", lstm_output, w) + b)   # (B, S, 1)
    scores = scores[..., 0]                                            # (B, S)
    aw = jax.nn.softmax(scores, axis=1)                                # (B, S)
    ctx = jnp.einsum("bs,bsh->bh", aw, lstm_output)                    # (B, H)
    return ctx, aw


if __name__ == "__main__":
    key = jax.random.PRNGKey(0)

    def run_case(B, S, H, **kw):
        kx, kw_, kb = jax.random.split(jax.random.fold_in(key, B * 1000 + S), 3)
        lstm_output = jax.random.normal(kx, (B, S, H), dtype=jnp.float32)
        w = jax.random.normal(kw_, (H, 1), dtype=jnp.float32) * 0.1
        b = jax.random.normal(kb, (1,), dtype=jnp.float32) * 0.1

        ctx, aw = attention_forward(lstm_output, w, b, **kw)
        ctx = jax.block_until_ready(ctx)
        aw = jax.block_until_ready(aw)

        ctx_ref, aw_ref = _reference(lstm_output, w, b)
        assert ctx.shape == (B, H) and aw.shape == (B, S)
        assert jnp.allclose(ctx, ctx_ref, atol=1e-5, rtol=1e-5)
        assert jnp.allclose(aw, aw_ref, atol=1e-5, rtol=1e-5)

    # Module-sized toy shapes (batch=2, seq=8, hidden=32): single grid step.
    run_case(2, 8, 32)
    # Larger case exercising batch-blocked specs and the MXU reductions.
    run_case(16, 64, 128)

    print("KERNEL_OK")
</pallas_src>

<mosaic_0001>
module attributes {stable_mosaic.version = 11 : i64} {
  func.func @kernel(%arg0: i32, %arg1: i32, %arg2: memref<1xf32, #tpu.memory_space<smem>>, %arg3: memref<2x8x32xf32, #tpu.memory_space<vmem>>, %arg4: memref<1x32xf32, #tpu.memory_space<vmem>>, %arg5: memref<2x32xf32, #tpu.memory_space<vmem>>, %arg6: memref<2x8xf32, #tpu.memory_space<vmem>>, %arg7: memref<2x1xf32, #tpu.memory_space<vmem>>, %arg8: memref<2x1xf32, #tpu.memory_space<vmem>>, %arg9: memref<2x32xf32, #tpu.memory_space<vmem>>, %arg10: memref<2x8xf32, #tpu.memory_space<vmem>>) attributes {dimension_semantics = [#tpu.dimension_semantics<parallel>, #tpu.dimension_semantics<arbitrary>], iteration_bounds = array<i64: 1, 1>, scalar_prefetch = 0 : i64, scratch_operands = 4 : i64, tpu.core_type = #tpu.core_type<tc>, window_params = [{transform_indices = @transform_0, window_bounds = array<i64: 1>}, {transform_indices = @transform_1, window_bounds = array<i64: 2, 8, 32>}, {pipeline_mode = #tpu.pipeline_mode<synchronous>, transform_indices = @transform_2, window_bounds = array<i64: 1, 32>}, {transform_indices = @transform_3, window_bounds = array<i64: 2, 32>}, {transform_indices = @transform_4, window_bounds = array<i64: 2, 8>}]} {
    %c0_i32 = arith.constant 0 : i32
    %0 = arith.cmpi eq, %arg1, %c0_i32 : i32
    %1 = arith.extui %0 : i1 to i32
    %c0_i32_0 = arith.constant 0 : i32
    %2 = arith.cmpi ne, %1, %c0_i32_0 : i32
    scf.if %2 {
      %cst_25 = arith.constant -1.000000e+30 : f32
      %42 = vector.broadcast %cst_25 : f32 to vector<2x1xf32>
      %c0_26 = arith.constant 0 : index
      %c0_27 = arith.constant 0 : index
      %43 = vector.load %arg7[%c0_26, %c0_27] : memref<2x1xf32, #tpu.memory_space<vmem>>, vector<2x1xf32>
      tpu.vector_store %arg7[%c0_26, %c0_27], %42 {strides = array<i32>} : memref<2x1xf32, #tpu.memory_space<vmem>>, vector<2x1xf32>,
      %cst_28 = arith.constant 0.000000e+00 : f32
      %44 = vector.broadcast %cst_28 : f32 to vector<2x1xf32>
      %c0_29 = arith.constant 0 : index
      %c0_30 = arith.constant 0 : index
      %45 = vector.load %arg8[%c0_29, %c0_30] : memref<2x1xf32, #tpu.memory_space<vmem>>, vector<2x1xf32>
      tpu.vector_store %arg8[%c0_29, %c0_30], %44 {strides = array<i32>} : memref<2x1xf32, #tpu.memory_space<vmem>>, vector<2x1xf32>,
      %cst_31 = arith.constant 0.000000e+00 : f32
      %46 = vector.broadcast %cst_31 : f32 to vector<2x32xf32>
      %c0_32 = arith.constant 0 : index
      %c0_33 = arith.constant 0 : index
      %47 = vector.load %arg9[%c0_32, %c0_33] : memref<2x32xf32, #tpu.memory_space<vmem>>, vector<2x32xf32>
      tpu.vector_store %arg9[%c0_32, %c0_33], %46 {strides = array<i32>} : memref<2x32xf32, #tpu.memory_space<vmem>>, vector<2x32xf32>,
    } else {
    }
    %c0 = arith.constant 0 : index
    %c0_1 = arith.constant 0 : index
    %c0_2 = arith.constant 0 : index
    %3 = vector.load %arg3[%c0, %c0_1, %c0_2] : memref<2x8x32xf32, #tpu.memory_space<vmem>>, vector<2x8x32xf32>
    %c0_3 = arith.constant 0 : index
    %4 = memref.load %arg2[%c0_3] : memref<1xf32, #tpu.memory_space<smem>>
    %c0_4 = arith.constant 0 : index
    %c0_5 = arith.constant 0 : index
    %5 = vector.load %arg4[%c0_4, %c0_5] : memref<1x32xf32, #tpu.memory_space<vmem>>, vector<1x32xf32>
    %6 = vector.shape_cast %5 : vector<1x32xf32> to vector<1x1x32xf32>
    %7 = vector.broadcast %6 : vector<1x1x32xf32> to vector<2x8x32xf32>
    %8 = arith.mulf %3, %7 : vector<2x8x32xf32>
    %cst = arith.constant dense<0.000000e+00> : vector<2x8xf32>
    %9 = vector.multi_reduction <add>, %8, %cst [2] : vector<2x8x32xf32> to vector<2x8xf32>
    %10 = vector.broadcast %4 : f32 to vector<2x8xf32>
    %11 = arith.addf %9, %10 : vector<2x8xf32>
    %12 = math.tanh %11 : vector<2x8xf32>
    %c0_6 = arith.constant 0 : index
    %c0_7 = arith.constant 0 : index
    %13 = vector.load %arg7[%c0_6, %c0_7] : memref<2x1xf32, #tpu.memory_space<vmem>>, vector<2x1xf32>
    %cst_8 = arith.constant dense<0xFF800000> : vector<2xf32>
    %14 = vector.multi_reduction <maximumf>, %12, %cst_8 [1] : vector<2x8xf32> to vector<2xf32>
    %15 = vector.shape_cast %14 : vector<2xf32> to vector<2x1xf32>
    %16 = arith.maximumf %13, %15 : vector<2x1xf32>
    %17 = arith.subf %13, %16 : vector<2x1xf32>
    %18 = math.exp %17 : vector<2x1xf32>
    %19 = vector.broadcast %16 : vector<2x1xf32> to vector<2x8xf32>
    %20 = arith.subf %12, %19 : vector<2x8xf32>
    %21 = math.exp %20 : vector<2x8xf32>
    %c0_9 = arith.constant 0 : index
    %c0_10 = arith.constant 0 : index
    %22 = vector.load %arg8[%c0_9, %c0_10] : memref<2x1xf32, #tpu.memory_space<vmem>>, vector<2x1xf32>
    %23 = arith.mulf %18, %22 : vector<2x1xf32>
    %cst_11 = arith.constant dense<0.000000e+00> : vector<2xf32>
    %24 = vector.multi_reduction <add>, %21, %cst_11 [1] : vector<2x8xf32> to vector<2xf32>
    %25 = vector.shape_cast %24 : vector<2xf32> to vector<2x1xf32>
    %26 = arith.addf %23, %25 : vector<2x1xf32>
    %c0_12 = arith.constant 0 : index
    %c0_13 = arith.constant 0 : index
    %27 = vector.load %arg8[%c0_12, %c0_13] : memref<2x1xf32, #tpu.memory_space<vmem>>, vector<2x1xf32>
    tpu.vector_store %arg8[%c0_12, %c0_13], %26 {strides = array<i32>} : memref<2x1xf32, #tpu.memory_space<vmem>>, vector<2x1xf32>,
    %28 = vector.shape_cast %21 : vector<2x8xf32> to vector<2x8x1xf32>
    %29 = vector.broadcast %28 : vector<2x8x1xf32> to vector<2x8x32xf32>
    %30 = arith.mulf %29, %3 : vector<2x8x32xf32>
    %cst_14 = arith.constant dense<0.000000e+00> : vector<2x32xf32>
    %31 = vector.multi_reduction <add>, %30, %cst_14 [1] : vector<2x8x32xf32> to vector<2x32xf32>
    %c0_15 = arith.constant 0 : index
    %c0_16 = arith.constant 0 : index
    %32 = vector.load %arg9[%c0_15, %c0_16] : memref<2x32xf32, #tpu.memory_space<vmem>>, vector<2x32xf32>
    %33 = vector.broadcast %18 : vector<2x1xf32> to vector<2x32xf32>
    %34 = arith.mulf %33, %32 : vector<2x32xf32>
    %35 = arith.addf %34, %31 : vector<2x32xf32>
    %c0_17 = arith.constant 0 : index
    %c0_18 = arith.constant 0 : index
    %36 = vector.load %arg9[%c0_17, %c0_18] : memref<2x32xf32, #tpu.memory_space<vmem>>, vector<2x32xf32>
    tpu.vector_store %arg9[%c0_17, %c0_18], %35 {strides = array<i32>} : memref<2x32xf32, #tpu.memory_space<vmem>>, vector<2x32xf32>,
    %c0_19 = arith.constant 0 : index
    %c0_20 = arith.constant 0 : index
    %37 = vector.load %arg7[%c0_19, %c0_20] : memref<2x1xf32, #tpu.memory_space<vmem>>, vector<2x1xf32>
    tpu.vector_store %arg7[%c0_19, %c0_20], %16 {strides = array<i32>} : memref<2x1xf32, #tpu.memory_space<vmem>>, vector<2x1xf32>,
    %c0_21 = arith.constant 0 : index
    %c0_22 = arith.constant 0 : index
    %38 = vector.load %arg10[%c0_21, %c0_22] : memref<2x8xf32, #tpu.memory_space<vmem>>, vector<2x8xf32>
    tpu.vector_store %arg10[%c0_21, %c0_22], %12 {strides = array<i32>} : memref<2x8xf32, #tpu.memory_space<vmem>>, vector<2x8xf32>,
    %c0_i32_23 = arith.constant 0 : i32
    %39 = arith.cmpi eq, %arg1, %c0_i32_23 : i32
    %40 = arith.extui %39 : i1 to i32
    %c0_i32_24 = arith.constant 0 : i32
    %41 = arith.cmpi ne, %40, %c0_i32_24 : i32
    scf.if %41 {
      %c0_25 = arith.constant 0 : index
      %c0_26 = arith.constant 0 : index
      %42 = vector.load %arg8[%c0_25, %c0_26] : memref<2x1xf32, #tpu.memory_space<vmem>>, vector<2x1xf32>
      %43 = tpu.reciprocal %42 {approx = true} : vector<2x1xf32> -> vector<2x1xf32>
      %44 = arith.mulf %42, %43 : vector<2x1xf32>
      %cst_27 = arith.constant 2.000000e+00 : f32
      %45 = vector.broadcast %cst_27 : f32 to vector<2x1xf32>
      %46 = arith.subf %45, %44 : vector<2x1xf32>
      %47 = arith.mulf %43, %46 : vector<2x1xf32>
      %c0_28 = arith.constant 0 : index
      %c0_29 = arith.constant 0 : index
      %48 = vector.load %arg9[%c0_28, %c0_29] : memref<2x32xf32, #tpu.memory_space<vmem>>, vector<2x32xf32>
      %49 = vector.broadcast %47 : vector<2x1xf32> to vector<2x32xf32>
      %50 = arith.mulf %48, %49 : vector<2x32xf32>
      %c0_30 = arith.constant 0 : index
      %c0_31 = arith.constant 0 : index
      %51 = vector.load %arg5[%c0_30, %c0_31] : memref<2x32xf32, #tpu.memory_space<vmem>>, vector<2x32xf32>
      tpu.vector_store %arg5[%c0_30, %c0_31], %50 {strides = array<i32>} : memref<2x32xf32, #tpu.memory_space<vmem>>, vector<2x32xf32>,
      %c0_32 = arith.constant 0 : index
      %c0_33 = arith.constant 0 : index
      %52 = vector.load %arg10[%c0_32, %c0_33] : memref<2x8xf32, #tpu.memory_space<vmem>>, vector<2x8xf32>
      %c0_34 = arith.constant 0 : index
      %c0_35 = arith.constant 0 : index
      %53 = vector.load %arg7[%c0_34, %c0_35] : memref<2x1xf32, #tpu.memory_space<vmem>>, vector<2x1xf32>
      %54 = vector.broadcast %53 : vector<2x1xf32> to vector<2x8xf32>
      %55 = arith.subf %52, %54 : vector<2x8xf32>
      %56 = math.exp %55 : vector<2x8xf32>
      %57 = vector.broadcast %47 : vector<2x1xf32> to vector<2x8xf32>
      %58 = arith.mulf %56, %57 : vector<2x8xf32>
      %c0_36 = arith.constant 0 : index
      %c0_37 = arith.constant 0 : index
      %59 = vector.load %arg6[%c0_36, %c0_37] : memref<2x8xf32, #tpu.memory_space<vmem>>, vector<2x8xf32>
      tpu.vector_store %arg6[%c0_36, %c0_37], %58 {strides = array<i32>} : memref<2x8xf32, #tpu.memory_space<vmem>>, vector<2x8xf32>,
    } else {
    }
    return
  }
  func.func @transform_0(%arg0: i32, %arg1: i32) -> i32 {
    %c0_i32 = arith.constant 0 : i32
    %c0_i32_0 = arith.constant 0 : i32
    return %c0_i32 : i32
  }
  func.func @transform_1(%arg0: i32, %arg1: i32) -> (i32, i32, i32) {
    %c0_i32 = arith.constant 0 : i32
    %c0_i32_0 = arith.constant 0 : i32
    return %arg0, %arg1, %c0_i32 : i32, i32, i32
  }
  func.func @transform_2(%arg0: i32, %arg1: i32) -> (i32, i32) {
    %c0_i32 = arith.constant 0 : i32
    %c0_i32_0 = arith.constant 0 : i32
    %c0_i32_1 = arith.constant 0 : i32
    return %c0_i32, %c0_i32_0 : i32, i32
  }
  func.func @transform_3(%arg0: i32, %arg1: i32) -> (i32, i32) {
    %c0_i32 = arith.constant 0 : i32
    %c0_i32_0 = arith.constant 0 : i32
    return %arg0, %c0_i32 : i32, i32
  }
  func.func @transform_4(%arg0: i32, %arg1: i32) -> (i32, i32) {
    %c0_i32 = arith.constant 0 : i32
    %c0_i32_0 = arith.constant 0 : i32
    return %arg0, %c0_i32 : i32, i32
  }
}

</mosaic_0001>

<llo_original>
// kernel: tpu_custom_call.1
$region0: #{tpu_custom_call.1}
  #allocation0 [shape = 'u32[]', space=smem, size = 0x4, offset = 0x4, fixed_abs, tag = 'smem constant byte address 0x4 - core index']
  #allocation1 [shape = 'u32[144,128]{1,0:T(1,128)}', space=vmem, size = 0x12000, scoped, tag = 'internal scratch']
  #allocation2 [shape = 'f32[2,1]{1,0:T(2,128)}', space=vmem, size = 0x400, scoped, tag = 'scratch operand']
  #allocation3 [shape = 'f32[2,1]{1,0:T(2,128)}', space=vmem, size = 0x400, scoped, tag = 'scratch operand']
  #allocation4 [shape = 'f32[2,32]{1,0:T(2,128)}', space=vmem, size = 0x400, scoped, tag = 'scratch operand']
  #allocation5 [shape = 'f32[2,8]{1,0:T(2,128)}', space=vmem, size = 0x400, scoped, tag = 'scratch operand']
  #allocation6 [shape = 'f32[1]{0:T(128)S(6)}', space=smem, size = 0x200, scoped, tag = 'scoped memory for tpu_custom_call.1']
  %s0 = inlined_call_operand.<no memory space> [shape: f32[1], index: 0, kind: input, shape index: {}]
  %s1 = inlined_call_operand.hbm [shape: f32[2,8,32], index: 1, kind: input, shape index: {}]
  %s2 = inlined_call_operand.hbm [shape: f32[1,32], index: 2, kind: input, shape index: {}]
  %s3 = inlined_call_operand.hbm [shape: f32[2,32], index: 3, kind: output, shape index: {0}]
  %s4 = inlined_call_operand.hbm [shape: f32[2,8], index: 4, kind: output, shape index: {1}]
  %5 = xla_tuple %s3, %s4
  %s6 = sld [smem:[#allocation0]]
  $region46: #{tpu_custom_call.1} parent=0
    _
  %s8 = ssub.s32 1, %s6
  %s9 = scalar_select 0, %s8, %s6
  %10 = sst [smem:[#allocation6]] %s0
  $region1: #{tpu_custom_call.1} parent=0
    #allocation7 [shape = 'u8[8192]{0}', space=vmem, size = 0x2000, scoped, tag = 'input window, operand 1, single buffered']
    #allocation8 [shape = 's32[1]{0}', space=sflag, size = 0x4, scoped, tag = 'scoped memory for tpu_custom_call.1']
    #allocation9 [shape = 's32[1]{0}', space=sflag, size = 0x4, scoped, tag = 'scoped memory for tpu_custom_call.1']
    #allocation10 [shape = 'u8[512]{0}', space=vmem, size = 0x400, scoped, tag = 'input window, operand 2, single buffered']
    #allocation11 [shape = 's32[1]{0}', space=sflag, size = 0x4, scoped, tag = 'scoped memory for tpu_custom_call.1']
    #allocation12 [shape = 'u8[1024]{0}', space=vmem, size = 0x400, scoped, tag = 'output window, operand 0, single buffered']
    #allocation13 [shape = 'u8[1024]{0}', space=vmem, size = 0x400, scoped, tag = 'output window, operand 1, single buffered']
    #allocation14 [shape = 's32[1]{0}', space=sflag, size = 0x4, scoped, tag = 'scoped memory for tpu_custom_call.1']
    %11 = vsyncpa [#allocation8], 0
    %12 = vsyncpa [#allocation11], 0
    %13 = vsyncpa [#allocation9], 0
    %14 = vsyncpa [#allocation14], 0
    // Predicated region
    $region2: #{tpu_custom_call.1} parent=1 // pred_check
      _
    $region3: #{tpu_custom_call.1} parent=1 // pred_check_branch
      %16 = sbr.rel (0) target = $region5
    $region4: #{tpu_custom_call.1} parent=1 // pred_region
      _
    $region5: #{tpu_custom_call.1} parent=1 // pred_fallthru
      _
    // Predicated region
    $region6: #{tpu_custom_call.1} parent=1 // pred_check
      _
    $region7: #{tpu_custom_call.1} parent=1 // pred_check_branch
      %18 = sbr.rel (0) target = $region9
    $region8: #{tpu_custom_call.1} parent=1 // pred_region
      %s20 = ssub.s32 256, 256
      %21 = vsyncadd [#allocation8], %s20
      %s22 = sshll.u32 [#allocation7], 4
      %s23 = int_to_ptr.vmem [resolvable:$true] %s22
      %28 = dma.hbm_to_vmem [thread:$0]  %s1, 256, %s23, [#allocation8], 128, 128, 8
    $region9: #{tpu_custom_call.1} parent=1 // pred_fallthru
      _
    // Predicated region
    $region10: #{tpu_custom_call.1} parent=1 // pred_check
      _
    $region11: #{tpu_custom_call.1} parent=1 // pred_check_branch
      %30 = sbr.rel (0) target = $region13
    $region12: #{tpu_custom_call.1} parent=1 // pred_region
      %s32 = ssub.s32 16, 16
      %33 = vsyncadd [#allocation11], %s32
      %s35 = sshll.u32 [#allocation10], 4
      %s36 = int_to_ptr.vmem [resolvable:$true] %s35
      %38 = dma.hbm_to_vmem [thread:$0]  %s2, 16, %s36, [#allocation11]
    $region13: #{tpu_custom_call.1} parent=1 // pred_fallthru
      _
    // Predicated region
    $region14: #{tpu_custom_call.1} parent=1 // pred_check
      _
    $region15: #{tpu_custom_call.1} parent=1 // pred_check_branch
      %40 = sbr.rel (0) target = $region17
    $region16: #{tpu_custom_call.1} parent=1 // pred_region
      %41 = dma.done [#allocation8], 256
    $region17: #{tpu_custom_call.1} parent=1 // pred_fallthru
      _
    // Predicated region
    $region18: #{tpu_custom_call.1} parent=1 // pred_check
      _
    $region19: #{tpu_custom_call.1} parent=1 // pred_check_branch
      %43 = sbr.rel (0) target = $region21
    $region20: #{tpu_custom_call.1} parent=1 // pred_region
      %44 = dma.done [#allocation11], 16
    $region21: #{tpu_custom_call.1} parent=1 // pred_fallthru
      _
    %p45 = scmp.eq.s32.totalorder 0, 0
    // Predicated region
    $region22: #{tpu_custom_call.1} parent=1 // pred_check
      %p46 = pneg %p45
    $region23: #{tpu_custom_call.1} parent=1 // pred_check_branch
      %48 = sbr.rel (%p46) target = $region25
    $region24: #{tpu_custom_call.1} parent=1 // pred_region
      %vm49 = vcmask 1024
      %50 = vst.msk [vmem:[#allocation2] sm:$0x3] %vm49, -1e+30
      %51 = vst.msk [vmem:[#allocation3] sm:$0x3] %vm49, 0.0
      %vm52 = vcmask 254976
      %53 = vst.msk [vmem:[#allocation4] sm:$0x3] %vm52, 0.0
    $region25: #{tpu_custom_call.1} parent=1 // pred_fallthru
      _
    %v54 = vld [vmem:[#allocation7] sm:$0xff]
    %v55 = vld [vmem:[#allocation7 + $0x8] sm:$0xff]
    %s56 = sld [smem:[#allocation6]]
    %v57 = vld [vmem:[#allocation10] sm:$0x1]
    %v59 = vlaneseq
    %v60 = vshrl.u32 %v59, 7
    %v61 = vsub.s32 0, %v60
    %v62 = vrot.slane %v57, %v61
    %v64 = vmul.f32 %v54, %v62
    %v65 = vmul.f32 %v55, %v62
    %vm66 = vcmask 261120
    %v67 = vsel %vm66, %v64, 0.0
    %68 = vadd.xlane.f32.xlu0 %v67
    %v69 = vpop.xlane.xlu0 %68
    %v70 = vsel %vm66, %v65, 0.0
    %71 = vadd.xlane.f32.xlu0 %v70
    %v72 = vpop.xlane.xlu0 %71
    %v73 = vstv %s56
    %v74 = vadd.f32 %v69, %v73
    %v75 = vadd.f32 %v72, %v73
    %v76 = vtanh.pop %v74
    %v77 = vtanh.pop %v75
    %v78 = vld [vmem:[#allocation2] sm:$0x3]
    %v81 = vlaneseq
    %v82 = vand.u32 %v81, 127
    %v83 = vlaneseq
    %v84 = vshrl.u32 %v83, 7
    %v85 = vsub.s32 %v82, %v84
    %v86 = vrot.slane %v76, %v85
    %v87 = vlaneseq
    %v88 = vshrl.u32 %v87, 7
    %v89 = vsub.s32 %v82, %v88
    %v90 = vrot.slane %v77, %v89
    %vm91 = vcmask 1041409
    %v92 = vsel %vm91, %v90, %v86
    %vm94 = vcmask 58368
    %v95 = vsel %vm94, %v92, -inf
    %96 = vmax.xlane.f32.xlu0 %v95
    %v97 = vpop.xlane.xlu0 %96
    %v98 = vmax.f32 %v78, %v97
    %v99 = vsub.f32 %v78, %v98
    %v100 = vmul.f32 %v99, 1.442695
    %v101 = vpow.pop %v100
    %103 = vset.pattern.permute.xlu0 0
    %104 = vperm.xlu0 %103, %v98
    %v105 = vpop.permute.xlu0 %104
    %v106 = vlaneseq
    %v107 = vshrl.u32 %v106, 7
    %v108 = vsub.s32 0, %v107
    %v109 = vrot.slane %v105, %v108
    %v110 = vlaneseq
    %v111 = vshrl.u32 %v110, 7
    %v112 = vsub.s32 1, %v111
    %v113 = vrot.slane %v105, %v112
    %v116 = vsub.f32 %v76, %v109
    %v117 = vsub.f32 %v77, %v113
    %v118 = vmul.f32 %v116, 1.442695
    %v119 = vpow.pop %v118
    %v120 = vmul.f32 %v117, 1.442695
    %v121 = vpow.pop %v120
    %v122 = vld [vmem:[#allocation3] sm:$0x3]
    %v123 = vmul.f32 %v101, %v122
    %126 = vset.pattern.permute.xlu0 0
    %127 = vperm.xlu0 %126, %v119
    %v128 = vpop.permute.xlu0 %127
    %129 = vset.pattern.permute.xlu0 0
    %130 = vperm.xlu0 %129, %v121
    %v131 = vpop.permute.xlu0 %130
    %v132 = vlaneseq
    %v133 = vshrl.u32 %v132, 7
    %v134 = vsub.s32 %v82, %v133
    %v135 = vrot.slane %v128, %v134
    %v136 = vlaneseq
    %v137 = vshrl.u32 %v136, 7
    %v138 = vsub.s32 %v82, %v137
    %v139 = vrot.slane %v131, %v138
    %v140 = vsel %vm91, %v139, %v135
    %v142 = vsel %vm94, %v140, 0.0
    %143 = vadd.xlane.f32.xlu0 %v142
    %v144 = vpop.xlane.xlu0 %143
    %v145 = vadd.f32 %v123, %v144
    %vm146 = vcmask 1024
    %147 = vst.msk [vmem:[#allocation3] sm:$0x3] %vm146, %v145
    %v150 = vmul.f32 %v128, %v54
    %v151 = vmul.f32 %v131, %v55
    %v152 = vsel %vm66, %v150, 0.0
    %v153 = vrot.slane %v152, 4
    %v154 = vadd.f32 %v152, %v153
    %v155 = vrot.slane %v154, 2
    %v156 = vadd.f32 %v154, %v155
    %v157 = vrot.slane %v156, 1
    %v158 = vadd.f32 %v156, %v157
    %v159 = vsel %vm66, %v151, 0.0
    %v160 = vrot.slane %v159, 4
    %v161 = vadd.f32 %v159, %v160
    %v162 = vrot.slane %v161, 2
    %v163 = vadd.f32 %v161, %v162
    %v164 = vrot.slane %v163, 1
    %v165 = vadd.f32 %v163, %v164
    %v166 = vld [vmem:[#allocation4] sm:$0x3]
    %168 = vset.pattern.permute.xlu0 0
    %169 = vperm.xlu0 %168, %v101
    %v170 = vpop.permute.xlu0 %169
    %v172 = vmul.f32 %v170, %v166
    %v175 = vsel %vm91, %v165, %v158
    %v177 = vadd.f32 %v172, %v175
    %vm178 = vcmask 254976
    %179 = vst.msk [vmem:[#allocation4] sm:$0x3] %vm178, %v177
    %180 = vst.msk [vmem:[#allocation2] sm:$0x3] %vm146, %v98
    %181 = vst.msk [vmem:[#allocation5] sm:$0x3] %vm94, %v92
    // Predicated region
    $region26: #{tpu_custom_call.1} parent=1 // pred_check
      %p182 = pneg %p45
    $region27: #{tpu_custom_call.1} parent=1 // pred_check_branch
      %184 = sbr.rel (%p182) target = $region29
    $region28: #{tpu_custom_call.1} parent=1 // pred_region
      %v185 = vld [vmem:[#allocation3] sm:$0x3]
      %v186 = vrcp.pop %v185
      %v187 = vmul.f32 %v185, %v186
      %v188 = vsub.f32 2.0, %v187
      %v189 = vmul.f32 %v186, %v188
      %v190 = vld [vmem:[#allocation4] sm:$0x3]
      %192 = vset.pattern.permute.xlu0 0
      %193 = vperm.xlu0 %192, %v189
      %v194 = vpop.permute.xlu0 %193
      %v196 = vmul.f32 %v190, %v194
      %197 = vst.msk [vmem:[#allocation12] sm:$0x3] %vm178, %v196
      %v198 = vld [vmem:[#allocation5] sm:$0x3]
      %v199 = vld [vmem:[#allocation2] sm:$0x3]
      %201 = vset.pattern.permute.xlu0 0
      %202 = vperm.xlu0 %201, %v199
      %v203 = vpop.permute.xlu0 %202
      %v205 = vsub.f32 %v198, %v203
      %v206 = vmul.f32 %v205, 1.442695
      %v207 = vpow.pop %v206
      %v208 = vmul.f32 %v207, %v194
      %209 = vst.msk [vmem:[#allocation13] sm:$0x3] %vm94, %v208
    $region29: #{tpu_custom_call.1} parent=1 // pred_fallthru
      _
    // Predicated region
    $region30: #{tpu_custom_call.1} parent=1 // pred_check
      _
    $region31: #{tpu_custom_call.1} parent=1 // pred_check_branch
      %211 = sbr.rel (0) target = $region33
    $region32: #{tpu_custom_call.1} parent=1 // pred_region
      %s213 = ssub.s32 32, 32
      %214 = vsyncadd [#allocation9], %s213
      %s216 = sshll.u32 [#allocation12], 4
      %s217 = int_to_ptr.vmem [resolvable:$true] %s216
      %219 = dma.vmem_to_hbm [thread:$0]  %s217, 32, %s3, [#allocation9]
    $region33: #{tpu_custom_call.1} parent=1 // pred_fallthru
      _
    // Predicated region
    $region34: #{tpu_custom_call.1} parent=1 // pred_check
      _
    $region35: #{tpu_custom_call.1} parent=1 // pred_check_branch
      %221 = sbr.rel (0) target = $region37
    $region36: #{tpu_custom_call.1} parent=1 // pred_region
      %s223 = ssub.s32 32, 32
      %224 = vsyncadd [#allocation14], %s223
      %s226 = sshll.u32 [#allocation13], 4
      %s227 = int_to_ptr.vmem [resolvable:$true] %s226
      %229 = dma.vmem_to_hbm [thread:$0]  %s227, 32, %s4, [#allocation14]
    $region37: #{tpu_custom_call.1} parent=1 // pred_fallthru
      _
    // Predicated region
    $region38: #{tpu_custom_call.1} parent=1 // pred_check
      _
    $region39: #{tpu_custom_call.1} parent=1 // pred_check_branch
      %231 = sbr.rel (0) target = $region41
    $region40: #{tpu_custom_call.1} parent=1 // pred_region
      %232 = dma.done [#allocation9], 32
    $region41: #{tpu_custom_call.1} parent=1 // pred_fallthru
      _
    // Predicated region
    $region42: #{tpu_custom_call.1} parent=1 // pred_check
      _
    $region43: #{tpu_custom_call.1} parent=1 // pred_check_branch
      %234 = sbr.rel (0) target = $region45
    $region44: #{tpu_custom_call.1} parent=1 // pred_region
      %235 = dma.done [#allocation14], 32
    $region45: #{tpu_custom_call.1} parent=1 // pred_fallthru
      _
    %236 = vsyncpa [#allocation8], 1
    %237 = vsyncpa [#allocation11], 1
    %238 = vsyncpa [#allocation9], 1
    %239 = vsyncpa [#allocation14], 1

</llo_original>
